<compile_context>
chip_gen: v7x
topology: tpu7x:2x2x1
jax: 0.10.0
libtpu: 0.0.40
codegen_flags: <defaults>
</compile_context>

<pallas_src>
from functools import partial

import jax
import jax.numpy as jnp
from jax.experimental import pallas as pl


def _linear_folded_bias_kernel(x_ref, w_ref, o_ref, *, k):
    """o = x @ W_aug[:k] + W_aug[k]   (bf16 operands, f32 MXU accumulation).

    x_ref:  [M, K]   float32 (cast to bf16 in-register)
    w_ref:  [K+1, N] bfloat16 (last row is the folded bias)
    o_ref:  [M, N]   float32
    """
    x_bf = x_ref[...].astype(jnp.bfloat16)
    w_main = w_ref[:k, :]                                   # [K, N] bf16
    bias = w_ref[k:k + 1, :].astype(jnp.float32)            # [1, N] f32
    acc = jnp.dot(x_bf, w_main, preferred_element_type=jnp.float32)
    o_ref[...] = (acc + bias).astype(o_ref.dtype)


def pallas_linear_folded(x_flat, w_aug):
    """x_flat: [M, K] f32, w_aug: [K+1, N] bf16 -> [M, N] f32.

    Gridless single invocation: full arrays land in VMEM, one MXU dot, one
    bias add, one store. No grid => no pipeline buffers or per-step overhead.
    """
    M, K = x_flat.shape
    kp1, N = w_aug.shape
    assert kp1 == K + 1, (kp1, K)

    cost = pl.CostEstimate(
        flops=2 * M * K * N,
        transcendentals=0,
        bytes_accessed=(x_flat.size * x_flat.dtype.itemsize
                        + w_aug.size * w_aug.dtype.itemsize
                        + M * N * 4),
    )

    return pl.pallas_call(
        partial(_linear_folded_bias_kernel, k=K),
        out_shape=jax.ShapeDtypeStruct((M, N), jnp.float32),
        cost_estimate=cost,
    )(x_flat, w_aug)


def prepare_params(params):
    """One-time parameter prep (NOT per call): fold bias into W, cast to bf16."""
    w = params["w"].astype(jnp.float32)                     # [D, NUM_CLASSES]
    b = params["b"].astype(jnp.float32)                     # [NUM_CLASSES]
    w_aug = jnp.concatenate([w, b[None, :]], axis=0)        # [D+1, NUM_CLASSES]
    return {"w_aug": w_aug.astype(jnp.bfloat16)}


@jax.jit
def simple_forward_wrapper(x, prepared):
    """Equivalent of SimpleForwardWrapper(model)(x) -> model(x)['logits'].

    x: [B, C, H, W] float32 (NCHW). Returns logits [B, NUM_CLASSES] float32.
    """
    w_aug = prepared["w_aug"]                               # [D+1, NUM_CLASSES]
    D = w_aug.shape[0] - 1
    B = x.shape[0]

    x_flat = x.reshape(B, D)                                # contiguous, free
    logits = pallas_linear_folded(x_flat, w_aug)

    # The inner model returns {'logits': logits}; the wrapper selects 'logits'.
    result = {"logits": logits}
    return result["logits"]


if __name__ == "__main__":
    B, C, H, W = 2, 4, 16, 16
    NUM_CLASSES = 32
    D = C * H * W

    key = jax.random.PRNGKey(0)
    kx, kw, kb = jax.random.split(key, 3)

    x = jax.random.normal(kx, (B, C, H, W), dtype=jnp.float32)
    params = {
        "w": jax.random.normal(kw, (D, NUM_CLASSES), dtype=jnp.float32) * 0.02,
        "b": jax.random.normal(kb, (NUM_CLASSES,), dtype=jnp.float32) * 0.01,
    }

    prepared = prepare_params(params)
    logits = jax.block_until_ready(simple_forward_wrapper(x, prepared))

    # Reference check in plain f32 JAX; tolerance loosened because the kernel
    # runs the MXU on bf16 operands (f32 accumulation).
    ref = x.reshape(B, D) @ params["w"] + params["b"]
    assert logits.shape == (B, NUM_CLASSES)
    assert jnp.allclose(logits, ref, atol=3e-2, rtol=3e-2)

    print("KERNEL_OK")
</pallas_src>

<mosaic_0001>
module attributes {stable_mosaic.version = 11 : i64} {
  func.func @_linear_folded_bias_kernel(%arg0: memref<2x1024xf32, #tpu.memory_space<vmem>>, %arg1: memref<1025x32xbf16, #tpu.memory_space<vmem>>, %arg2: memref<2x32xf32, #tpu.memory_space<vmem>>) attributes {dimension_semantics = [], scalar_prefetch = 0 : i64, scratch_operands = 0 : i64, tpu.core_type = #tpu.core_type<tc>} {
    %c0 = arith.constant 0 : index
    %c0_0 = arith.constant 0 : index
    %0 = vector.load %arg0[%c0, %c0_0] : memref<2x1024xf32, #tpu.memory_space<vmem>>, vector<2x1024xf32>
    %1 = arith.truncf %0 : vector<2x1024xf32> to vector<2x1024xbf16>
    %c0_1 = arith.constant 0 : index
    %c0_2 = arith.constant 0 : index
    %2 = vector.load %arg1[%c0_1, %c0_2] : memref<1025x32xbf16, #tpu.memory_space<vmem>>, vector<1024x32xbf16>
    %c1024 = arith.constant 1024 : index
    %c0_3 = arith.constant 0 : index
    %3 = vector.load %arg1[%c1024, %c0_3] : memref<1025x32xbf16, #tpu.memory_space<vmem>>, vector<1x32xbf16>
    %4 = arith.extf %3 : vector<1x32xbf16> to vector<1x32xf32>
    %cst = arith.constant dense<0.000000e+00> : vector<2x32xf32>
    %5 = tpu.matmul %1, %2, %cst {dimension_numbers = #tpu.dot_dimension_numbers<[1], [0], [0], [1], [0, 0, 1, 1], [], []>} : vector<2x1024xbf16>, vector<1024x32xbf16>, vector<2x32xf32> -> vector<2x32xf32>
    %6 = vector.broadcast %4 : vector<1x32xf32> to vector<2x32xf32>
    %7 = arith.addf %5, %6 : vector<2x32xf32>
    %c0_4 = arith.constant 0 : index
    %c0_5 = arith.constant 0 : index
    %8 = vector.load %arg2[%c0_4, %c0_5] : memref<2x32xf32, #tpu.memory_space<vmem>>, vector<2x32xf32>
    tpu.vector_store %arg2[%c0_4, %c0_5], %7 {strides = array<i32>} : memref<2x32xf32, #tpu.memory_space<vmem>>, vector<2x32xf32>,
    return
  }
}

</mosaic_0001>

<llo_original>
// kernel: simple_forward_wrapper.1
$region0: #{simple_forward_wrapper.1}
  #allocation0 [shape = 'u32[]', space=smem, size = 0x4, offset = 0x4, fixed_abs, tag = 'smem constant byte address 0x4 - core index']
  #allocation1 [shape = 'u32[144,128]{1,0:T(1,128)}', space=vmem, size = 0x12000, scoped, tag = 'internal scratch']
  %s0 = inlined_call_operand.vmem [shape: f32[2,1024], index: 0, kind: input, shape index: {}]
  %s1 = inlined_call_operand.vmem [shape: bf16[1025,32], index: 1, kind: input, shape index: {}]
  %s2 = inlined_call_operand.hbm [shape: f32[2,32], index: 2, kind: output, shape index: {}]
  %s3 = sld [smem:[#allocation0]]
  $region18: #{simple_forward_wrapper.1} parent=0
    _
  %s5 = ssub.s32 1, %s3
  %s6 = scalar_select 0, %s5, %s3
  $region1: #{simple_forward_wrapper.1} parent=0
    #allocation2 [shape = 'u8[1024]{0}', space=vmem, size = 0x400, scoped, tag = 'output window, operand 0, single buffered']
    #allocation3 [shape = 's32[1]{0}', space=sflag, size = 0x4, scoped, tag = 'scoped memory for simple_forward_wrapper.1']
    %7 = vsyncpa [#allocation3], 0
    // Predicated region
    $region2: #{simple_forward_wrapper.1} parent=1 // pred_check
      _
    $region3: #{simple_forward_wrapper.1} parent=1 // pred_check_branch
      %9 = sbr.rel (0) target = $region5
    $region4: #{simple_forward_wrapper.1} parent=1 // pred_region
      _
    $region5: #{simple_forward_wrapper.1} parent=1 // pred_fallthru
      _
    // Predicated region
    $region6: #{simple_forward_wrapper.1} parent=1 // pred_check
      _
    $region7: #{simple_forward_wrapper.1} parent=1 // pred_check_branch
      %11 = sbr.rel (0) target = $region9
    $region8: #{simple_forward_wrapper.1} parent=1 // pred_region
      _
    $region9: #{simple_forward_wrapper.1} parent=1 // pred_fallthru
      _
    %v13 = vld [vmem:[%s0] sm:$0xff]
    %v14 = vld [vmem:[%s0 + $0x8] sm:$0xff]
    %v17 = vcombine.high %v13, %v13
    %v19 = vunpack.c.l.s4 1983009808
    %v20 = vunpack.c.0.s8 %v19
    %v21 = vlaneseq
    %v22 = vshrl.u32 %v21, 7
    %v23 = vsub.s32 %v20, %v22
    %v24 = vrot.slane %v13, %v23
    %v26 = vunpack.c.l.s4 1983009808
    %v27 = vunpack.c.0.s8 %v26
    %v28 = vlaneseq
    %v29 = vshrl.u32 %v28, 7
    %v30 = vsub.s32 %v27, %v29
    %v31 = vrot.slane %v17, %v30
    %v32 = vcombine.high %v24, %v24
    %v33 = vcombine.high %v31, %v31
    %v34 = vcombine.high %v14, %v14
    %v36 = vunpack.c.l.s4 1983009808
    %v37 = vunpack.c.0.s8 %v36
    %v38 = vlaneseq
    %v39 = vshrl.u32 %v38, 7
    %v40 = vsub.s32 %v37, %v39
    %v41 = vrot.slane %v14, %v40
    %v43 = vunpack.c.l.s4 1983009808
    %v44 = vunpack.c.0.s8 %v43
    %v45 = vlaneseq
    %v46 = vshrl.u32 %v45, 7
    %v47 = vsub.s32 %v44, %v46
    %v48 = vrot.slane %v34, %v47
    %v49 = vcombine.high %v41, %v41
    %v50 = vcombine.high %v48, %v48
    %v59 = vpack.c.bf16 %v24, %v24
    %v60 = vpack.c.bf16 %v32, %v32
    %v61 = vpack.c.bf16 %v31, %v31
    %v62 = vpack.c.bf16 %v33, %v33
    %v63 = vpack.c.bf16 %v41, %v41
    %v64 = vpack.c.bf16 %v49, %v49
    %v65 = vpack.c.bf16 %v48, %v48
    %v66 = vpack.c.bf16 %v50, %v50
    %v67 = vld [vmem:[%s1] sm:$0xf]
    %v68 = vld [vmem:[%s1 + $0x4] sm:$0xf]
    %v69 = vld [vmem:[%s1 + $0x8] sm:$0xf]
    %v70 = vld [vmem:[%s1 + $0xc] sm:$0xf]
    %v71 = vld [vmem:[%s1 + $0x10] sm:$0xf]
    %v72 = vld [vmem:[%s1 + $0x14] sm:$0xf]
    %v73 = vld [vmem:[%s1 + $0x18] sm:$0xf]
    %v74 = vld [vmem:[%s1 + $0x1c] sm:$0xf]
    %v75 = vld [vmem:[%s1 + $0x20] sm:$0xf]
    %v76 = vld [vmem:[%s1 + $0x24] sm:$0xf]
    %v77 = vld [vmem:[%s1 + $0x28] sm:$0xf]
    %v78 = vld [vmem:[%s1 + $0x2c] sm:$0xf]
    %v79 = vld [vmem:[%s1 + $0x30] sm:$0xf]
    %v80 = vld [vmem:[%s1 + $0x34] sm:$0xf]
    %v81 = vld [vmem:[%s1 + $0x38] sm:$0xf]
    %v82 = vld [vmem:[%s1 + $0x3c] sm:$0xf]
    %v83 = vld [vmem:[%s1 + $0x40] sm:$0xf]
    %v84 = vld [vmem:[%s1 + $0x44] sm:$0xf]
    %v85 = vld [vmem:[%s1 + $0x48] sm:$0xf]
    %v86 = vld [vmem:[%s1 + $0x4c] sm:$0xf]
    %v87 = vld [vmem:[%s1 + $0x50] sm:$0xf]
    %v88 = vld [vmem:[%s1 + $0x54] sm:$0xf]
    %v89 = vld [vmem:[%s1 + $0x58] sm:$0xf]
    %v90 = vld [vmem:[%s1 + $0x5c] sm:$0xf]
    %v91 = vld [vmem:[%s1 + $0x60] sm:$0xf]
    %v92 = vld [vmem:[%s1 + $0x64] sm:$0xf]
    %v93 = vld [vmem:[%s1 + $0x68] sm:$0xf]
    %v94 = vld [vmem:[%s1 + $0x6c] sm:$0xf]
    %v95 = vld [vmem:[%s1 + $0x70] sm:$0xf]
    %v96 = vld [vmem:[%s1 + $0x74] sm:$0xf]
    %v97 = vld [vmem:[%s1 + $0x78] sm:$0xf]
    %v98 = vld [vmem:[%s1 + $0x7c] sm:$0xf]
    %v99 = vld [vmem:[%s1 + $0x80] sm:$0xf]
    %v100 = vld [vmem:[%s1 + $0x84] sm:$0xf]
    %v101 = vld [vmem:[%s1 + $0x88] sm:$0xf]
    %v102 = vld [vmem:[%s1 + $0x8c] sm:$0xf]
    %v103 = vld [vmem:[%s1 + $0x90] sm:$0xf]
    %v104 = vld [vmem:[%s1 + $0x94] sm:$0xf]
    %v105 = vld [vmem:[%s1 + $0x98] sm:$0xf]
    %v106 = vld [vmem:[%s1 + $0x9c] sm:$0xf]
    %v107 = vld [vmem:[%s1 + $0xa0] sm:$0xf]
    %v108 = vld [vmem:[%s1 + $0xa4] sm:$0xf]
    %v109 = vld [vmem:[%s1 + $0xa8] sm:$0xf]
    %v110 = vld [vmem:[%s1 + $0xac] sm:$0xf]
    %v111 = vld [vmem:[%s1 + $0xb0] sm:$0xf]
    %v112 = vld [vmem:[%s1 + $0xb4] sm:$0xf]
    %v113 = vld [vmem:[%s1 + $0xb8] sm:$0xf]
    %v114 = vld [vmem:[%s1 + $0xbc] sm:$0xf]
    %v115 = vld [vmem:[%s1 + $0xc0] sm:$0xf]
    %v116 = vld [vmem:[%s1 + $0xc4] sm:$0xf]
    %v117 = vld [vmem:[%s1 + $0xc8] sm:$0xf]
    %v118 = vld [vmem:[%s1 + $0xcc] sm:$0xf]
    %v119 = vld [vmem:[%s1 + $0xd0] sm:$0xf]
    %v120 = vld [vmem:[%s1 + $0xd4] sm:$0xf]
    %v121 = vld [vmem:[%s1 + $0xd8] sm:$0xf]
    %v122 = vld [vmem:[%s1 + $0xdc] sm:$0xf]
    %v123 = vld [vmem:[%s1 + $0xe0] sm:$0xf]
    %v124 = vld [vmem:[%s1 + $0xe4] sm:$0xf]
    %v125 = vld [vmem:[%s1 + $0xe8] sm:$0xf]
    %v126 = vld [vmem:[%s1 + $0xec] sm:$0xf]
    %v127 = vld [vmem:[%s1 + $0xf0] sm:$0xf]
    %v128 = vld [vmem:[%s1 + $0xf4] sm:$0xf]
    %v129 = vld [vmem:[%s1 + $0xf8] sm:$0xf]
    %v130 = vld [vmem:[%s1 + $0xfc] sm:$0xf]
    %v131 = vld [vmem:[%s1 + $0x100] sm:$0xf]
    %v132 = vld [vmem:[%s1 + $0x104] sm:$0xf]
    %v133 = vld [vmem:[%s1 + $0x108] sm:$0xf]
    %v134 = vld [vmem:[%s1 + $0x10c] sm:$0xf]
    %v135 = vld [vmem:[%s1 + $0x110] sm:$0xf]
    %v136 = vld [vmem:[%s1 + $0x114] sm:$0xf]
    %v137 = vld [vmem:[%s1 + $0x118] sm:$0xf]
    %v138 = vld [vmem:[%s1 + $0x11c] sm:$0xf]
    %v139 = vld [vmem:[%s1 + $0x120] sm:$0xf]
    %v140 = vld [vmem:[%s1 + $0x124] sm:$0xf]
    %v141 = vld [vmem:[%s1 + $0x128] sm:$0xf]
    %v142 = vld [vmem:[%s1 + $0x12c] sm:$0xf]
    %v143 = vld [vmem:[%s1 + $0x130] sm:$0xf]
    %v144 = vld [vmem:[%s1 + $0x134] sm:$0xf]
    %v145 = vld [vmem:[%s1 + $0x138] sm:$0xf]
    %v146 = vld [vmem:[%s1 + $0x13c] sm:$0xf]
    %v147 = vld [vmem:[%s1 + $0x140] sm:$0xf]
    %v148 = vld [vmem:[%s1 + $0x144] sm:$0xf]
    %v149 = vld [vmem:[%s1 + $0x148] sm:$0xf]
    %v150 = vld [vmem:[%s1 + $0x14c] sm:$0xf]
    %v151 = vld [vmem:[%s1 + $0x150] sm:$0xf]
    %v152 = vld [vmem:[%s1 + $0x154] sm:$0xf]
    %v153 = vld [vmem:[%s1 + $0x158] sm:$0xf]
    %v154 = vld [vmem:[%s1 + $0x15c] sm:$0xf]
    %v155 = vld [vmem:[%s1 + $0x160] sm:$0xf]
    %v156 = vld [vmem:[%s1 + $0x164] sm:$0xf]
    %v157 = vld [vmem:[%s1 + $0x168] sm:$0xf]
    %v158 = vld [vmem:[%s1 + $0x16c] sm:$0xf]
    %v159 = vld [vmem:[%s1 + $0x170] sm:$0xf]
    %v160 = vld [vmem:[%s1 + $0x174] sm:$0xf]
    %v161 = vld [vmem:[%s1 + $0x178] sm:$0xf]
    %v162 = vld [vmem:[%s1 + $0x17c] sm:$0xf]
    %v163 = vld [vmem:[%s1 + $0x180] sm:$0xf]
    %v164 = vld [vmem:[%s1 + $0x184] sm:$0xf]
    %v165 = vld [vmem:[%s1 + $0x188] sm:$0xf]
    %v166 = vld [vmem:[%s1 + $0x18c] sm:$0xf]
    %v167 = vld [vmem:[%s1 + $0x190] sm:$0xf]
    %v168 = vld [vmem:[%s1 + $0x194] sm:$0xf]
    %v169 = vld [vmem:[%s1 + $0x198] sm:$0xf]
    %v170 = vld [vmem:[%s1 + $0x19c] sm:$0xf]
    %v171 = vld [vmem:[%s1 + $0x1a0] sm:$0xf]
    %v172 = vld [vmem:[%s1 + $0x1a4] sm:$0xf]
    %v173 = vld [vmem:[%s1 + $0x1a8] sm:$0xf]
    %v174 = vld [vmem:[%s1 + $0x1ac] sm:$0xf]
    %v175 = vld [vmem:[%s1 + $0x1b0] sm:$0xf]
    %v176 = vld [vmem:[%s1 + $0x1b4] sm:$0xf]
    %v177 = vld [vmem:[%s1 + $0x1b8] sm:$0xf]
    %v178 = vld [vmem:[%s1 + $0x1bc] sm:$0xf]
    %v179 = vld [vmem:[%s1 + $0x1c0] sm:$0xf]
    %v180 = vld [vmem:[%s1 + $0x1c4] sm:$0xf]
    %v181 = vld [vmem:[%s1 + $0x1c8] sm:$0xf]
    %v182 = vld [vmem:[%s1 + $0x1cc] sm:$0xf]
    %v183 = vld [vmem:[%s1 + $0x1d0] sm:$0xf]
    %v184 = vld [vmem:[%s1 + $0x1d4] sm:$0xf]
    %v185 = vld [vmem:[%s1 + $0x1d8] sm:$0xf]
    %v186 = vld [vmem:[%s1 + $0x1dc] sm:$0xf]
    %v187 = vld [vmem:[%s1 + $0x1e0] sm:$0xf]
    %v188 = vld [vmem:[%s1 + $0x1e4] sm:$0xf]
    %v189 = vld [vmem:[%s1 + $0x1e8] sm:$0xf]
    %v190 = vld [vmem:[%s1 + $0x1ec] sm:$0xf]
    %v191 = vld [vmem:[%s1 + $0x1f0] sm:$0xf]
    %v192 = vld [vmem:[%s1 + $0x1f4] sm:$0xf]
    %v193 = vld [vmem:[%s1 + $0x1f8] sm:$0xf]
    %v194 = vld [vmem:[%s1 + $0x1fc] sm:$0xf]
    %v195 = vld [vmem:[%s1 + $0x200] sm:$0x1]
    %v196 = vunpack.c.l.bf16 %v195
    %v197 = vlaneseq
    %v198 = vshrl.u32 %v197, 7
    %v199 = vsub.s32 0, %v198
    %v200 = vrot.slane %v196, %v199
    %v329 = vunpack.c.l.b16 %v67
    %v330 = vunpack.c.l.b16 %v68
    %v331 = vunpack.c.l.b16 %v69
    %v332 = vunpack.c.l.b16 %v70
    %v333 = vunpack.c.l.b16 %v71
    %v334 = vunpack.c.l.b16 %v72
    %v335 = vunpack.c.l.b16 %v73
    %v336 = vunpack.c.l.b16 %v74
    %v337 = vunpack.c.l.b16 %v75
    %v338 = vunpack.c.l.b16 %v76
    %v339 = vunpack.c.l.b16 %v77
    %v340 = vunpack.c.l.b16 %v78
    %v341 = vunpack.c.l.b16 %v79
    %v342 = vunpack.c.l.b16 %v80
    %v343 = vunpack.c.l.b16 %v81
    %v344 = vunpack.c.l.b16 %v82
    %v345 = vunpack.c.l.b16 %v83
    %v346 = vunpack.c.l.b16 %v84
    %v347 = vunpack.c.l.b16 %v85
    %v348 = vunpack.c.l.b16 %v86
    %v349 = vunpack.c.l.b16 %v87
    %v350 = vunpack.c.l.b16 %v88
    %v351 = vunpack.c.l.b16 %v89
    %v352 = vunpack.c.l.b16 %v90
    %v353 = vunpack.c.l.b16 %v91
    %v354 = vunpack.c.l.b16 %v92
    %v355 = vunpack.c.l.b16 %v93
    %v356 = vunpack.c.l.b16 %v94
    %v357 = vunpack.c.l.b16 %v95
    %v358 = vunpack.c.l.b16 %v96
    %v359 = vunpack.c.l.b16 %v97
    %v360 = vunpack.c.l.b16 %v98
    %v361 = vunpack.c.l.b16 %v99
    %v362 = vunpack.c.l.b16 %v100
    %v363 = vunpack.c.l.b16 %v101
    %v364 = vunpack.c.l.b16 %v102
    %v365 = vunpack.c.l.b16 %v103
    %v366 = vunpack.c.l.b16 %v104
    %v367 = vunpack.c.l.b16 %v105
    %v368 = vunpack.c.l.b16 %v106
    %v369 = vunpack.c.l.b16 %v107
    %v370 = vunpack.c.l.b16 %v108
    %v371 = vunpack.c.l.b16 %v109
    %v372 = vunpack.c.l.b16 %v110
    %v373 = vunpack.c.l.b16 %v111
    %v374 = vunpack.c.l.b16 %v112
    %v375 = vunpack.c.l.b16 %v113
    %v376 = vunpack.c.l.b16 %v114
    %v377 = vunpack.c.l.b16 %v115
    %v378 = vunpack.c.l.b16 %v116
    %v379 = vunpack.c.l.b16 %v117
    %v380 = vunpack.c.l.b16 %v118
    %v381 = vunpack.c.l.b16 %v119
    %v382 = vunpack.c.l.b16 %v120
    %v383 = vunpack.c.l.b16 %v121
    %v384 = vunpack.c.l.b16 %v122
    %v385 = vunpack.c.l.b16 %v123
    %v386 = vunpack.c.l.b16 %v124
    %v387 = vunpack.c.l.b16 %v125
    %v388 = vunpack.c.l.b16 %v126
    %v389 = vunpack.c.l.b16 %v127
    %v390 = vunpack.c.l.b16 %v128
    %v391 = vunpack.c.l.b16 %v129
    %v392 = vunpack.c.l.b16 %v130
    %v393 = vunpack.c.l.b16 %v131
    %v394 = vunpack.c.l.b16 %v132
    %v395 = vunpack.c.l.b16 %v133
    %v396 = vunpack.c.l.b16 %v134
    %v397 = vunpack.c.l.b16 %v135
    %v398 = vunpack.c.l.b16 %v136
    %v399 = vunpack.c.l.b16 %v137
    %v400 = vunpack.c.l.b16 %v138
    %v401 = vunpack.c.l.b16 %v139
    %v402 = vunpack.c.l.b16 %v140
    %v403 = vunpack.c.l.b16 %v141
    %v404 = vunpack.c.l.b16 %v142
    %v405 = vunpack.c.l.b16 %v143
    %v406 = vunpack.c.l.b16 %v144
    %v407 = vunpack.c.l.b16 %v145
    %v408 = vunpack.c.l.b16 %v146
    %v409 = vunpack.c.l.b16 %v147
    %v410 = vunpack.c.l.b16 %v148
    %v411 = vunpack.c.l.b16 %v149
    %v412 = vunpack.c.l.b16 %v150
    %v413 = vunpack.c.l.b16 %v151
    %v414 = vunpack.c.l.b16 %v152
    %v415 = vunpack.c.l.b16 %v153
    %v416 = vunpack.c.l.b16 %v154
    %v417 = vunpack.c.l.b16 %v155
    %v418 = vunpack.c.l.b16 %v156
    %v419 = vunpack.c.l.b16 %v157
    %v420 = vunpack.c.l.b16 %v158
    %v421 = vunpack.c.l.b16 %v159
    %v422 = vunpack.c.l.b16 %v160
    %v423 = vunpack.c.l.b16 %v161
    %v424 = vunpack.c.l.b16 %v162
    %v425 = vunpack.c.l.b16 %v163
    %v426 = vunpack.c.l.b16 %v164
    %v427 = vunpack.c.l.b16 %v165
    %v428 = vunpack.c.l.b16 %v166
    %v429 = vunpack.c.l.b16 %v167
    %v430 = vunpack.c.l.b16 %v168
    %v431 = vunpack.c.l.b16 %v169
    %v432 = vunpack.c.l.b16 %v170
    %v433 = vunpack.c.l.b16 %v171
    %v434 = vunpack.c.l.b16 %v172
    %v435 = vunpack.c.l.b16 %v173
    %v436 = vunpack.c.l.b16 %v174
    %v437 = vunpack.c.l.b16 %v175
    %v438 = vunpack.c.l.b16 %v176
    %v439 = vunpack.c.l.b16 %v177
    %v440 = vunpack.c.l.b16 %v178
    %v441 = vunpack.c.l.b16 %v179
    %v442 = vunpack.c.l.b16 %v180
    %v443 = vunpack.c.l.b16 %v181
    %v444 = vunpack.c.l.b16 %v182
    %v445 = vunpack.c.l.b16 %v183
    %v446 = vunpack.c.l.b16 %v184
    %v447 = vunpack.c.l.b16 %v185
    %v448 = vunpack.c.l.b16 %v186
    %v449 = vunpack.c.l.b16 %v187
    %v450 = vunpack.c.l.b16 %v188
    %v451 = vunpack.c.l.b16 %v189
    %v452 = vunpack.c.l.b16 %v190
    %v453 = vunpack.c.l.b16 %v191
    %v454 = vunpack.c.l.b16 %v192
    %v455 = vunpack.c.l.b16 %v193
    %v456 = vunpack.c.l.b16 %v194
    %v457 = vpack.c.b16 %v330, %v329
    %v458 = vpack.c.b16 %v332, %v331
    %v459 = vpack.c.b16 %v334, %v333
    %v460 = vpack.c.b16 %v336, %v335
    %v461 = vpack.c.b16 %v338, %v337
    %v462 = vpack.c.b16 %v340, %v339
    %v463 = vpack.c.b16 %v342, %v341
    %v464 = vpack.c.b16 %v344, %v343
    %v465 = vpack.c.b16 %v346, %v345
    %v466 = vpack.c.b16 %v348, %v347
    %v467 = vpack.c.b16 %v350, %v349
    %v468 = vpack.c.b16 %v352, %v351
    %v469 = vpack.c.b16 %v354, %v353
    %v470 = vpack.c.b16 %v356, %v355
    %v471 = vpack.c.b16 %v358, %v357
    %v472 = vpack.c.b16 %v360, %v359
    %v473 = vpack.c.b16 %v362, %v361
    %v474 = vpack.c.b16 %v364, %v363
    %v475 = vpack.c.b16 %v366, %v365
    %v476 = vpack.c.b16 %v368, %v367
    %v477 = vpack.c.b16 %v370, %v369
    %v478 = vpack.c.b16 %v372, %v371
    %v479 = vpack.c.b16 %v374, %v373
    %v480 = vpack.c.b16 %v376, %v375
    %v481 = vpack.c.b16 %v378, %v377
    %v482 = vpack.c.b16 %v380, %v379
    %v483 = vpack.c.b16 %v382, %v381
    %v484 = vpack.c.b16 %v384, %v383
    %v485 = vpack.c.b16 %v386, %v385
    %v486 = vpack.c.b16 %v388, %v387
    %v487 = vpack.c.b16 %v390, %v389
    %v488 = vpack.c.b16 %v392, %v391
    %v489 = vpack.c.b16 %v394, %v393
    %v490 = vpack.c.b16 %v396, %v395
    %v491 = vpack.c.b16 %v398, %v397
    %v492 = vpack.c.b16 %v400, %v399
    %v493 = vpack.c.b16 %v402, %v401
    %v494 = vpack.c.b16 %v404, %v403
    %v495 = vpack.c.b16 %v406, %v405
    %v496 = vpack.c.b16 %v408, %v407
    %v497 = vpack.c.b16 %v410, %v409
    %v498 = vpack.c.b16 %v412, %v411
    %v499 = vpack.c.b16 %v414, %v413
    %v500 = vpack.c.b16 %v416, %v415
    %v501 = vpack.c.b16 %v418, %v417
    %v502 = vpack.c.b16 %v420, %v419
    %v503 = vpack.c.b16 %v422, %v421
    %v504 = vpack.c.b16 %v424, %v423
    %v505 = vpack.c.b16 %v426, %v425
    %v506 = vpack.c.b16 %v428, %v427
    %v507 = vpack.c.b16 %v430, %v429
    %v508 = vpack.c.b16 %v432, %v431
    %v509 = vpack.c.b16 %v434, %v433
    %v510 = vpack.c.b16 %v436, %v435
    %v511 = vpack.c.b16 %v438, %v437
    %v512 = vpack.c.b16 %v440, %v439
    %v513 = vpack.c.b16 %v442, %v441
    %v514 = vpack.c.b16 %v444, %v443
    %v515 = vpack.c.b16 %v446, %v445
    %v516 = vpack.c.b16 %v448, %v447
    %v517 = vpack.c.b16 %v450, %v449
    %v518 = vpack.c.b16 %v452, %v451
    %v519 = vpack.c.b16 %v454, %v453
    %v520 = vpack.c.b16 %v456, %v455
    %585 = vmatprep.subr.bf16.mxu0 0
    %586 = vmatpush1.bf16.msra.mxu0 %v457
    %587 = vmatprep.subr.bf16.mxu0 0
    %588 = vmatpush1.bf16.msra.mxu0 %v458
    %589 = vmatprep.subr.bf16.mxu0 0
    %590 = vmatpush1.bf16.msra.mxu0 %v459
    %591 = vmatprep.subr.bf16.mxu0 0
    %592 = vmatpush1.bf16.msra.mxu0 %v460
    %593 = vmatprep.subr.bf16.mxu0 0
    %594 = vmatpush1.bf16.msra.mxu0 %v461
    %595 = vmatprep.subr.bf16.mxu0 0
    %596 = vmatpush1.bf16.msra.mxu0 %v462
    %597 = vmatprep.subr.bf16.mxu0 0
    %598 = vmatpush1.bf16.msra.mxu0 %v463
    %599 = vmatprep.subr.bf16.mxu0 0
    %600 = vmatpush1.bf16.msra.mxu0 %v464
    %601 = vmatprep.subr.bf16.mxu0 0
    %602 = vmatpush1.bf16.msra.mxu0 %v465
    %603 = vmatprep.subr.bf16.mxu0 0
    %604 = vmatpush1.bf16.msra.mxu0 %v466
    %605 = vmatprep.subr.bf16.mxu0 0
    %606 = vmatpush1.bf16.msra.mxu0 %v467
    %607 = vmatprep.subr.bf16.mxu0 0
    %608 = vmatpush1.bf16.msra.mxu0 %v468
    %609 = vmatprep.subr.bf16.mxu0 0
    %610 = vmatpush1.bf16.msra.mxu0 %v469
    %611 = vmatprep.subr.bf16.mxu0 0
    %612 = vmatpush1.bf16.msra.mxu0 %v470
    %613 = vmatprep.subr.bf16.mxu0 0
    %614 = vmatpush1.bf16.msra.mxu0 %v471
    %615 = vmatprep.subr.bf16.mxu0 0
    %616 = vmatpush1.bf16.msra.mxu0 %v472
    %617 = vmatprep.mubr.bf16.mxu0 %v60
    %618 = vmatmul.mubr.bf16.gmra.mrb[0].mxu0 %v59
    %v619 = vpop.f32.mrb[0].mxu0
    %v620 = vadd.f32 %v200, %v619
    %v621 = vpop.f32.mrb[0].mxu0
    %v622 = vpop.f32.mrb[0].mxu0
    %v623 = vpop.f32.mrb[0].mxu0
    %624 = vdwg.mxu0
    %625 = vmatprep.subr.bf16.mxu0 0
    %626 = vmatpush1.bf16.msra.mxu0 %v473
    %627 = vmatprep.subr.bf16.mxu0 0
    %628 = vmatpush1.bf16.msra.mxu0 %v474
    %629 = vmatprep.subr.bf16.mxu0 0
    %630 = vmatpush1.bf16.msra.mxu0 %v475
    %631 = vmatprep.subr.bf16.mxu0 0
    %632 = vmatpush1.bf16.msra.mxu0 %v476
    %633 = vmatprep.subr.bf16.mxu0 0
    %634 = vmatpush1.bf16.msra.mxu0 %v477
    %635 = vmatprep.subr.bf16.mxu0 0
    %636 = vmatpush1.bf16.msra.mxu0 %v478
    %637 = vmatprep.subr.bf16.mxu0 0
    %638 = vmatpush1.bf16.msra.mxu0 %v479
    %639 = vmatprep.subr.bf16.mxu0 0
    %640 = vmatpush1.bf16.msra.mxu0 %v480
    %641 = vmatprep.subr.bf16.mxu0 0
    %642 = vmatpush1.bf16.msra.mxu0 %v481
    %643 = vmatprep.subr.bf16.mxu0 0
    %644 = vmatpush1.bf16.msra.mxu0 %v482
    %645 = vmatprep.subr.bf16.mxu0 0
    %646 = vmatpush1.bf16.msra.mxu0 %v483
    %647 = vmatprep.subr.bf16.mxu0 0
    %648 = vmatpush1.bf16.msra.mxu0 %v484
    %649 = vmatprep.subr.bf16.mxu0 0
    %650 = vmatpush1.bf16.msra.mxu0 %v485
    %651 = vmatprep.subr.bf16.mxu0 0
    %652 = vmatpush1.bf16.msra.mxu0 %v486
    %653 = vmatprep.subr.bf16.mxu0 0
    %654 = vmatpush1.bf16.msra.mxu0 %v487
    %655 = vmatprep.subr.bf16.mxu0 0
    %656 = vmatpush1.bf16.msra.mxu0 %v488
    %657 = vmatprep.mubr.bf16.mxu0 %v62
    %658 = vmatmul.mubr.bf16.gmra.mrb[0].mxu0 %v61
    %v659 = vpop.f32.mrb[0].mxu0
    %v660 = vadd.f32 %v620, %v659
    %v661 = vpop.f32.mrb[0].mxu0
    %v662 = vpop.f32.mrb[0].mxu0
    %v663 = vpop.f32.mrb[0].mxu0
    %664 = vdwg.mxu0
    %665 = vmatprep.subr.bf16.mxu0 0
    %666 = vmatpush1.bf16.msra.mxu0 %v489
    %667 = vmatprep.subr.bf16.mxu0 0
    %668 = vmatpush1.bf16.msra.mxu0 %v490
    %669 = vmatprep.subr.bf16.mxu0 0
    %670 = vmatpush1.bf16.msra.mxu0 %v491
    %671 = vmatprep.subr.bf16.mxu0 0
    %672 = vmatpush1.bf16.msra.mxu0 %v492
    %673 = vmatprep.subr.bf16.mxu0 0
    %674 = vmatpush1.bf16.msra.mxu0 %v493
    %675 = vmatprep.subr.bf16.mxu0 0
    %676 = vmatpush1.bf16.msra.mxu0 %v494
    %677 = vmatprep.subr.bf16.mxu0 0
    %678 = vmatpush1.bf16.msra.mxu0 %v495
    %679 = vmatprep.subr.bf16.mxu0 0
    %680 = vmatpush1.bf16.msra.mxu0 %v496
    %681 = vmatprep.subr.bf16.mxu0 0
    %682 = vmatpush1.bf16.msra.mxu0 %v497
    %683 = vmatprep.subr.bf16.mxu0 0
    %684 = vmatpush1.bf16.msra.mxu0 %v498
    %685 = vmatprep.subr.bf16.mxu0 0
    %686 = vmatpush1.bf16.msra.mxu0 %v499
    %687 = vmatprep.subr.bf16.mxu0 0
    %688 = vmatpush1.bf16.msra.mxu0 %v500
    %689 = vmatprep.subr.bf16.mxu0 0
    %690 = vmatpush1.bf16.msra.mxu0 %v501
    %691 = vmatprep.subr.bf16.mxu0 0
    %692 = vmatpush1.bf16.msra.mxu0 %v502
    %693 = vmatprep.subr.bf16.mxu0 0
    %694 = vmatpush1.bf16.msra.mxu0 %v503
    %695 = vmatprep.subr.bf16.mxu0 0
    %696 = vmatpush1.bf16.msra.mxu0 %v504
    %697 = vmatprep.mubr.bf16.mxu0 %v64
    %698 = vmatmul.mubr.bf16.gmra.mrb[0].mxu0 %v63
    %v699 = vpop.f32.mrb[0].mxu0
    %v700 = vadd.f32 %v660, %v699
    %v701 = vpop.f32.mrb[0].mxu0
    %v702 = vpop.f32.mrb[0].mxu0
    %v703 = vpop.f32.mrb[0].mxu0
    %704 = vdwg.mxu0
    %705 = vmatprep.subr.bf16.mxu0 0
    %706 = vmatpush1.bf16.msra.mxu0 %v505
    %707 = vmatprep.subr.bf16.mxu0 0
    %708 = vmatpush1.bf16.msra.mxu0 %v506
    %709 = vmatprep.subr.bf16.mxu0 0
    %710 = vmatpush1.bf16.msra.mxu0 %v507
    %711 = vmatprep.subr.bf16.mxu0 0
    %712 = vmatpush1.bf16.msra.mxu0 %v508
    %713 = vmatprep.subr.bf16.mxu0 0
    %714 = vmatpush1.bf16.msra.mxu0 %v509
    %715 = vmatprep.subr.bf16.mxu0 0
    %716 = vmatpush1.bf16.msra.mxu0 %v510
    %717 = vmatprep.subr.bf16.mxu0 0
    %718 = vmatpush1.bf16.msra.mxu0 %v511
    %719 = vmatprep.subr.bf16.mxu0 0
    %720 = vmatpush1.bf16.msra.mxu0 %v512
    %721 = vmatprep.subr.bf16.mxu0 0
    %722 = vmatpush1.bf16.msra.mxu0 %v513
    %723 = vmatprep.subr.bf16.mxu0 0
    %724 = vmatpush1.bf16.msra.mxu0 %v514
    %725 = vmatprep.subr.bf16.mxu0 0
    %726 = vmatpush1.bf16.msra.mxu0 %v515
    %727 = vmatprep.subr.bf16.mxu0 0
    %728 = vmatpush1.bf16.msra.mxu0 %v516
    %729 = vmatprep.subr.bf16.mxu0 0
    %730 = vmatpush1.bf16.msra.mxu0 %v517
    %731 = vmatprep.subr.bf16.mxu0 0
    %732 = vmatpush1.bf16.msra.mxu0 %v518
    %733 = vmatprep.subr.bf16.mxu0 0
    %734 = vmatpush1.bf16.msra.mxu0 %v519
    %735 = vmatprep.subr.bf16.mxu0 0
    %736 = vmatpush1.bf16.msra.mxu0 %v520
    %737 = vmatprep.mubr.bf16.mxu0 %v66
    %738 = vmatmul.mubr.bf16.gmra.mrb[0].mxu0 %v65
    %v739 = vpop.f32.mrb[0].mxu0
    %v740 = vadd.f32 %v700, %v739
    %v741 = vpop.f32.mrb[0].mxu0
    %v742 = vpop.f32.mrb[0].mxu0
    %v743 = vpop.f32.mrb[0].mxu0
    %744 = vdwg.mxu0
    %vm745 = vcmask 254976
    %746 = vst.msk [vmem:[#allocation2] sm:$0x3] %vm745, %v740
    // Predicated region
    $region10: #{simple_forward_wrapper.1} parent=1 // pred_check
      _
    $region11: #{simple_forward_wrapper.1} parent=1 // pred_check_branch
      %748 = sbr.rel (0) target = $region13
    $region12: #{simple_forward_wrapper.1} parent=1 // pred_region
      %s750 = ssub.s32 32, 32
      %751 = vsyncadd [#allocation3], %s750
      %s753 = sshll.u32 [#allocation2], 4
      %s754 = int_to_ptr.vmem [resolvable:$true] %s753
      %756 = dma.vmem_to_hbm [thread:$0]  %s754, 32, %s2, [#allocation3]
    $region13: #{simple_forward_wrapper.1} parent=1 // pred_fallthru
      _
    // Predicated region
    $region14: #{simple_forward_wrapper.1} parent=1 // pred_check
      _
    $region15: #{simple_forward_wrapper.1} parent=1 // pred_check_branch
      %758 = sbr.rel (0) target = $region17
    $region16: #{simple_forward_wrapper.1} parent=1 // pred_region
      %759 = dma.done [#allocation3], 32
    $region17: #{simple_forward_wrapper.1} parent=1 // pred_fallthru
      _
    %760 = vsyncpa [#allocation3], 1

</llo_original>
